<compile_context>
chip_gen: v6e
topology: v6e:2x2x1
jax: 0.10.0
libtpu: 0.0.40
codegen_flags: <defaults>
</compile_context>

<pallas_src>
import jax
import jax.numpy as jnp
from jax.experimental import pallas as pl
from jax.experimental.pallas import tpu as pltpu


def _symnet_kernel(x_ref, w1_ref, b1_ref, w2_ref, b2_ref, y_ref, mid_ref):
    cdt = w1_ref.dtype                  # MXU compute dtype (bf16 or f32)

    x = x_ref[...].astype(cdt)          # (TM, D_in)  f32 in HBM, cast in-kernel (VPU filler)
    w1 = w1_ref[...]                    # (D_in, Hp)  VMEM-resident
    w2 = w2_ref[...]                    # (Hp, D_out) VMEM-resident
    b1 = b1_ref[...]                    # (1, Hp)     f32, broadcasts over rows
    b2 = b2_ref[...]                    # (1, D_out)  f32

    # hidden -> relu                    (f32 accumulate, f32 VPU epilogue)
    h1 = jnp.maximum(jnp.dot(x, w1, preferred_element_type=jnp.float32) + b1, 0.0)

    # output_linear (this is h_middle); exact w.r.t. H padding since padded h1 cols are 0.
    mid = jnp.dot(h1.astype(cdt), w2, preferred_element_type=jnp.float32) + b2

    # hidden (shared weights) -> relu; D_out == D_in so mid feeds W1 directly.
    h2 = jnp.maximum(jnp.dot(mid.astype(cdt), w1, preferred_element_type=jnp.float32) + b1, 0.0)

    # output_linear (shared weights)
    y = jnp.dot(h2.astype(cdt), w2, preferred_element_type=jnp.float32) + b2

    y_ref[...] = y.astype(y_ref.dtype)
    mid_ref[...] = mid.astype(mid_ref.dtype)


def _round_up(v, m):
    return ((v + m - 1) // m) * m


def prepare_params(w1, b1, w2, b2, *, compute_dtype=jnp.bfloat16):
    """Pad/cast the (tiny) weights once, outside the hot path.

    w1: (D_in, H), b1: (H,), w2: (H, D_out), b2: (D_out,) stored as
    (in_features, out_features) so the kernel computes y = x @ W + b.
    Only H is padded to 128 lanes; zero padding is exact (pad biases are zero,
    so padded activation columns stay zero through bias + ReLU).
    """
    d_in, h = w1.shape
    h_chk, d_out = w2.shape
    assert h_chk == h
    assert d_out == d_in, "SymmetricNet requires D_out == D_in (mid feeds back into hidden)"

    hp = _round_up(h, 128)
    f32 = jnp.float32
    w1p = jnp.zeros((d_in, hp), f32).at[:, :h].set(w1.astype(f32)).astype(compute_dtype)
    w2p = jnp.zeros((hp, d_out), f32).at[:h, :].set(w2.astype(f32)).astype(compute_dtype)
    b1p = jnp.zeros((1, hp), f32).at[0, :h].set(b1.astype(f32))
    b2p = b2.astype(f32).reshape(1, d_out)
    return w1p, b1p, w2p, b2p


def symmetric_net_padded(x, params, *, block_m=1024):
    """Run the kernel given pre-padded params from prepare_params()."""
    w1p, b1p, w2p, b2p = params
    n, d_in = x.shape
    assert w1p.shape[0] == d_in
    hp = w1p.shape[1]
    d_out = w2p.shape[1]

    x = x.astype(jnp.float32)

    # Batch tile: multiple of 8 (f32 sublane). For mid-size N cap tm near N/2 so the
    # batch grid has >= 2 steps (keeps both v7x TensorCores busy); large N uses block_m.
    tm = min(block_m, _round_up(n, 8))
    if n >= 16:
        tm = min(tm, _round_up(pl.cdiv(n, 2), 8))
    n_pad = _round_up(n, tm)
    if n_pad != n:
        x = jnp.zeros((n_pad, d_in), x.dtype).at[:n].set(x)
    grid = (n_pad // tm,)

    y, mid = pl.pallas_call(
        _symnet_kernel,
        out_shape=(
            jax.ShapeDtypeStruct((n_pad, d_out), jnp.float32),
            jax.ShapeDtypeStruct((n_pad, d_out), jnp.float32),
        ),
        grid=grid,
        in_specs=[
            pl.BlockSpec((tm, d_in), lambda i: (i, 0)),    # x: batch-tiled, unpadded lanes
            pl.BlockSpec((d_in, hp), lambda i: (0, 0)),    # W1: VMEM-resident
            pl.BlockSpec((1, hp), lambda i: (0, 0)),       # b1: resident
            pl.BlockSpec((hp, d_out), lambda i: (0, 0)),   # W2: resident
            pl.BlockSpec((1, d_out), lambda i: (0, 0)),    # b2: resident
        ],
        out_specs=(
            pl.BlockSpec((tm, d_out), lambda i: (i, 0)),   # y_pred
            pl.BlockSpec((tm, d_out), lambda i: (i, 0)),   # h_middle
        ),
        compiler_params=pltpu.CompilerParams(
            dimension_semantics=("parallel",),             # megacore-shard batch
            vmem_limit_bytes=32 << 20,                     # safe on v7x (64 MiB physical)
        ),
    )(x, w1p, b1p, w2p, b2p)

    return y[:n], mid[:n]


def symmetric_net(x, w1, b1, w2, b2, *, compute_dtype=jnp.bfloat16, block_m=1024):
    """Convenience wrapper: pads params then runs the kernel.

    For repeated calls, hoist prepare_params() out of the loop (or jit the caller
    so the padding constant-folds).
    """
    params = prepare_params(w1, b1, w2, b2, compute_dtype=compute_dtype)
    return symmetric_net_padded(x, params, block_m=block_m)


def _reference(x, w1, b1, w2, b2):
    h1 = jnp.maximum(x @ w1 + b1, 0.0)
    mid = h1 @ w2 + b2
    h2 = jnp.maximum(mid @ w1 + b1, 0.0)
    y = h2 @ w2 + b2
    return y, mid


if __name__ == "__main__":
    # Small shapes consistent with the module: D_out = D_in.
    N, D_IN, H = 8, 32, 64
    D_OUT = D_IN

    key = jax.random.PRNGKey(0)
    kx, kw1, kb1, kw2, kb2 = jax.random.split(key, 5)

    x = jax.random.normal(kx, (N, D_IN), dtype=jnp.float32)

    # Deterministic parameter init (PyTorch-Linear-style uniform ranges).
    lim1 = 1.0 / (D_IN ** 0.5)
    lim2 = 1.0 / (H ** 0.5)
    w1 = jax.random.uniform(kw1, (D_IN, H), minval=-lim1, maxval=lim1, dtype=jnp.float32)
    b1 = jax.random.uniform(kb1, (H,), minval=-lim1, maxval=lim1, dtype=jnp.float32)
    w2 = jax.random.uniform(kw2, (H, D_OUT), minval=-lim2, maxval=lim2, dtype=jnp.float32)
    b2 = jax.random.uniform(kb2, (D_OUT,), minval=-lim2, maxval=lim2, dtype=jnp.float32)

    y_ref, mid_ref = _reference(x, w1, b1, w2, b2)

    # 1) Default path: bf16 MXU inputs, f32 accumulation (single grid step, tiny N).
    #    Note: h_middle is an f32 accumulation of bf16 operands, so it differs from
    #    the exact f32 reference at ~1e-2 level.
    y_pred, h_middle = symmetric_net(x, w1, b1, w2, b2)
    jax.block_until_ready((y_pred, h_middle))
    assert y_pred.shape == (N, D_OUT) and h_middle.shape == (N, D_OUT)
    assert jnp.allclose(y_pred, y_ref, atol=2e-2, rtol=2e-2)
    assert jnp.allclose(h_middle, mid_ref, atol=2e-2, rtol=2e-2)

    # 2) f32 path with a multi-step batch grid (exercises the pipelined grid),
    #    bit-accurate to the reference within f32 MXU tolerance.
    N2 = 24
    x2 = jax.random.normal(jax.random.PRNGKey(1), (N2, D_IN), dtype=jnp.float32)
    y2, mid2 = symmetric_net(x2, w1, b1, w2, b2, compute_dtype=jnp.float32, block_m=8)
    jax.block_until_ready((y2, mid2))
    y2_ref, mid2_ref = _reference(x2, w1, b1, w2, b2)
    assert jnp.allclose(y2, y2_ref, atol=1e-4, rtol=1e-4)
    assert jnp.allclose(mid2, mid2_ref, atol=1e-4, rtol=1e-4)

    # 3) Mid-size batch: exercises the >=2-grid-step cap (megacore split) and the
    #    non-divisible batch tail padding, with hoisted pre-padded params.
    N3 = 100
    x3 = jax.random.normal(jax.random.PRNGKey(2), (N3, D_IN), dtype=jnp.float32)
    params_bf16 = prepare_params(w1, b1, w2, b2, compute_dtype=jnp.bfloat16)
    y3, mid3 = symmetric_net_padded(x3, params_bf16)
    jax.block_until_ready((y3, mid3))
    y3_ref, mid3_ref = _reference(x3, w1, b1, w2, b2)
    assert y3.shape == (N3, D_OUT) and mid3.shape == (N3, D_OUT)
    assert jnp.allclose(y3, y3_ref, atol=2e-2, rtol=2e-2)
    assert jnp.allclose(mid3, mid3_ref, atol=2e-2, rtol=2e-2)

    print("KERNEL_OK")
</pallas_src>

<mosaic_0001>
module attributes {stable_mosaic.version = 11 : i64} {
  func.func @_symnet_kernel(%arg0: i32, %arg1: memref<8x32xf32, #tpu.memory_space<vmem>>, %arg2: memref<32x128xbf16, #tpu.memory_space<vmem>>, %arg3: memref<1x128xf32, #tpu.memory_space<vmem>>, %arg4: memref<128x32xbf16, #tpu.memory_space<vmem>>, %arg5: memref<1x32xf32, #tpu.memory_space<vmem>>, %arg6: memref<8x32xf32, #tpu.memory_space<vmem>>, %arg7: memref<8x32xf32, #tpu.memory_space<vmem>>) attributes {dimension_semantics = [#tpu.dimension_semantics<parallel>], iteration_bounds = array<i64: 1>, scalar_prefetch = 0 : i64, scratch_operands = 0 : i64, tpu.core_type = #tpu.core_type<tc>, window_params = [{transform_indices = @transform_0, window_bounds = array<i64: 8, 32>}, {pipeline_mode = #tpu.pipeline_mode<synchronous>, transform_indices = @transform_1, window_bounds = array<i64: 32, 128>}, {pipeline_mode = #tpu.pipeline_mode<synchronous>, transform_indices = @transform_2, window_bounds = array<i64: 1, 128>}, {pipeline_mode = #tpu.pipeline_mode<synchronous>, transform_indices = @transform_3, window_bounds = array<i64: 128, 32>}, {pipeline_mode = #tpu.pipeline_mode<synchronous>, transform_indices = @transform_4, window_bounds = array<i64: 1, 32>}, {transform_indices = @transform_5, window_bounds = array<i64: 8, 32>}, {transform_indices = @transform_6, window_bounds = array<i64: 8, 32>}]} {
    %c0 = arith.constant 0 : index
    %c0_0 = arith.constant 0 : index
    %0 = vector.load %arg1[%c0, %c0_0] : memref<8x32xf32, #tpu.memory_space<vmem>>, vector<8x32xf32>
    %1 = arith.truncf %0 : vector<8x32xf32> to vector<8x32xbf16>
    %c0_1 = arith.constant 0 : index
    %c0_2 = arith.constant 0 : index
    %2 = vector.load %arg2[%c0_1, %c0_2] : memref<32x128xbf16, #tpu.memory_space<vmem>>, vector<32x128xbf16>
    %c0_3 = arith.constant 0 : index
    %c0_4 = arith.constant 0 : index
    %3 = vector.load %arg4[%c0_3, %c0_4] : memref<128x32xbf16, #tpu.memory_space<vmem>>, vector<128x32xbf16>
    %c0_5 = arith.constant 0 : index
    %c0_6 = arith.constant 0 : index
    %4 = vector.load %arg3[%c0_5, %c0_6] : memref<1x128xf32, #tpu.memory_space<vmem>>, vector<1x128xf32>
    %c0_7 = arith.constant 0 : index
    %c0_8 = arith.constant 0 : index
    %5 = vector.load %arg5[%c0_7, %c0_8] : memref<1x32xf32, #tpu.memory_space<vmem>>, vector<1x32xf32>
    %cst = arith.constant dense<0.000000e+00> : vector<8x128xf32>
    %6 = tpu.matmul %1, %2, %cst {dimension_numbers = #tpu.dot_dimension_numbers<[1], [0], [0], [1], [0, 0, 1, 1], [], []>} : vector<8x32xbf16>, vector<32x128xbf16>, vector<8x128xf32> -> vector<8x128xf32>
    %7 = vector.broadcast %4 : vector<1x128xf32> to vector<8x128xf32>
    %8 = arith.addf %6, %7 : vector<8x128xf32>
    %cst_9 = arith.constant 0.000000e+00 : f32
    %9 = vector.broadcast %cst_9 : f32 to vector<8x128xf32>
    %10 = arith.maximumf %8, %9 : vector<8x128xf32>
    %11 = arith.truncf %10 : vector<8x128xf32> to vector<8x128xbf16>
    %cst_10 = arith.constant dense<0.000000e+00> : vector<8x32xf32>
    %12 = tpu.matmul %11, %3, %cst_10 {dimension_numbers = #tpu.dot_dimension_numbers<[1], [0], [0], [1], [0, 0, 1, 1], [], []>} : vector<8x128xbf16>, vector<128x32xbf16>, vector<8x32xf32> -> vector<8x32xf32>
    %13 = vector.broadcast %5 : vector<1x32xf32> to vector<8x32xf32>
    %14 = arith.addf %12, %13 : vector<8x32xf32>
    %15 = arith.truncf %14 : vector<8x32xf32> to vector<8x32xbf16>
    %cst_11 = arith.constant dense<0.000000e+00> : vector<8x128xf32>
    %16 = tpu.matmul %15, %2, %cst_11 {dimension_numbers = #tpu.dot_dimension_numbers<[1], [0], [0], [1], [0, 0, 1, 1], [], []>} : vector<8x32xbf16>, vector<32x128xbf16>, vector<8x128xf32> -> vector<8x128xf32>
    %17 = vector.broadcast %4 : vector<1x128xf32> to vector<8x128xf32>
    %18 = arith.addf %16, %17 : vector<8x128xf32>
    %cst_12 = arith.constant 0.000000e+00 : f32
    %19 = vector.broadcast %cst_12 : f32 to vector<8x128xf32>
    %20 = arith.maximumf %18, %19 : vector<8x128xf32>
    %21 = arith.truncf %20 : vector<8x128xf32> to vector<8x128xbf16>
    %cst_13 = arith.constant dense<0.000000e+00> : vector<8x32xf32>
    %22 = tpu.matmul %21, %3, %cst_13 {dimension_numbers = #tpu.dot_dimension_numbers<[1], [0], [0], [1], [0, 0, 1, 1], [], []>} : vector<8x128xbf16>, vector<128x32xbf16>, vector<8x32xf32> -> vector<8x32xf32>
    %23 = vector.broadcast %5 : vector<1x32xf32> to vector<8x32xf32>
    %24 = arith.addf %22, %23 : vector<8x32xf32>
    %c0_14 = arith.constant 0 : index
    %c0_15 = arith.constant 0 : index
    %25 = vector.load %arg6[%c0_14, %c0_15] : memref<8x32xf32, #tpu.memory_space<vmem>>, vector<8x32xf32>
    tpu.vector_store %arg6[%c0_14, %c0_15], %24 {strides = array<i32>} : memref<8x32xf32, #tpu.memory_space<vmem>>, vector<8x32xf32>,
    %c0_16 = arith.constant 0 : index
    %c0_17 = arith.constant 0 : index
    %26 = vector.load %arg7[%c0_16, %c0_17] : memref<8x32xf32, #tpu.memory_space<vmem>>, vector<8x32xf32>
    tpu.vector_store %arg7[%c0_16, %c0_17], %14 {strides = array<i32>} : memref<8x32xf32, #tpu.memory_space<vmem>>, vector<8x32xf32>,
    return
  }
  func.func @transform_0(%arg0: i32) -> (i32, i32) {
    %c0_i32 = arith.constant 0 : i32
    %c0_i32_0 = arith.constant 0 : i32
    return %arg0, %c0_i32 : i32, i32
  }
  func.func @transform_1(%arg0: i32) -> (i32, i32) {
    %c0_i32 = arith.constant 0 : i32
    %c0_i32_0 = arith.constant 0 : i32
    %c0_i32_1 = arith.constant 0 : i32
    return %c0_i32, %c0_i32_0 : i32, i32
  }
  func.func @transform_2(%arg0: i32) -> (i32, i32) {
    %c0_i32 = arith.constant 0 : i32
    %c0_i32_0 = arith.constant 0 : i32
    %c0_i32_1 = arith.constant 0 : i32
    return %c0_i32, %c0_i32_0 : i32, i32
  }
  func.func @transform_3(%arg0: i32) -> (i32, i32) {
    %c0_i32 = arith.constant 0 : i32
    %c0_i32_0 = arith.constant 0 : i32
    %c0_i32_1 = arith.constant 0 : i32
    return %c0_i32, %c0_i32_0 : i32, i32
  }
  func.func @transform_4(%arg0: i32) -> (i32, i32) {
    %c0_i32 = arith.constant 0 : i32
    %c0_i32_0 = arith.constant 0 : i32
    %c0_i32_1 = arith.constant 0 : i32
    return %c0_i32, %c0_i32_0 : i32, i32
  }
  func.func @transform_5(%arg0: i32) -> (i32, i32) {
    %c0_i32 = arith.constant 0 : i32
    %c0_i32_0 = arith.constant 0 : i32
    return %arg0, %c0_i32 : i32, i32
  }
  func.func @transform_6(%arg0: i32) -> (i32, i32) {
    %c0_i32 = arith.constant 0 : i32
    %c0_i32_0 = arith.constant 0 : i32
    return %arg0, %c0_i32 : i32, i32
  }
}

</mosaic_0001>

<llo_original>
// kernel: tpu_custom_call.1
$region0: #{tpu_custom_call.1}
  #allocation0 [shape = 'u32[]', space=smem, size = 0x4, offset = 0x4, fixed_abs, tag = 'smem constant byte address 0x4 - core index']
  #allocation1 [shape = 'u32[144,128]{1,0:T(1,128)}', space=vmem, size = 0x12000, scoped, tag = 'internal scratch']
  %s0 = inlined_call_operand.vmem [shape: f32[8,32], index: 0, kind: input, shape index: {}]
  %s1 = inlined_call_operand.vmem [shape: bf16[32,128], index: 1, kind: input, shape index: {}]
  %s2 = inlined_call_operand.vmem [shape: f32[1,128], index: 2, kind: input, shape index: {}]
  %s3 = inlined_call_operand.vmem [shape: bf16[128,32], index: 3, kind: input, shape index: {}]
  %s4 = inlined_call_operand.vmem [shape: f32[1,32], index: 4, kind: input, shape index: {}]
  %s5 = inlined_call_operand.hbm [shape: f32[8,32], index: 5, kind: output, shape index: {0}]
  %s6 = inlined_call_operand.hbm [shape: f32[8,32], index: 6, kind: output, shape index: {1}]
  %7 = xla_tuple %s5, %s6
  %s8 = sld [smem:[#allocation0]]
  $region38: #{tpu_custom_call.1} parent=0
    _
  %s10 = ssub.s32 1, %s8
  %s11 = scalar_select 0, %s10, %s8
  $region1: #{tpu_custom_call.1} parent=0
    #allocation2 [shape = 'u8[4096]{0}', space=vmem, size = 0x1000, scoped, tag = 'output window, operand 0, single buffered']
    #allocation3 [shape = 's32[1]{0}', space=sflag, size = 0x4, scoped, tag = 'scoped memory for tpu_custom_call.1']
    #allocation4 [shape = 'u8[4096]{0}', space=vmem, size = 0x1000, scoped, tag = 'output window, operand 1, single buffered']
    #allocation5 [shape = 's32[1]{0}', space=sflag, size = 0x4, scoped, tag = 'scoped memory for tpu_custom_call.1']
    %12 = vsyncpa [#allocation3], 0
    %13 = vsyncpa [#allocation5], 0
    // Predicated region
    $region2: #{tpu_custom_call.1} parent=1 // pred_check
      _
    $region3: #{tpu_custom_call.1} parent=1 // pred_check_branch
      %15 = sbr.rel (0) target = $region5
    $region4: #{tpu_custom_call.1} parent=1 // pred_region
      _
    $region5: #{tpu_custom_call.1} parent=1 // pred_fallthru
      _
    // Predicated region
    $region6: #{tpu_custom_call.1} parent=1 // pred_check
      _
    $region7: #{tpu_custom_call.1} parent=1 // pred_check_branch
      %17 = sbr.rel (0) target = $region9
    $region8: #{tpu_custom_call.1} parent=1 // pred_region
      _
    $region9: #{tpu_custom_call.1} parent=1 // pred_fallthru
      _
    // Predicated region
    $region10: #{tpu_custom_call.1} parent=1 // pred_check
      _
    $region11: #{tpu_custom_call.1} parent=1 // pred_check_branch
      %19 = sbr.rel (0) target = $region13
    $region12: #{tpu_custom_call.1} parent=1 // pred_region
      _
    $region13: #{tpu_custom_call.1} parent=1 // pred_fallthru
      _
    // Predicated region
    $region14: #{tpu_custom_call.1} parent=1 // pred_check
      _
    $region15: #{tpu_custom_call.1} parent=1 // pred_check_branch
      %21 = sbr.rel (0) target = $region17
    $region16: #{tpu_custom_call.1} parent=1 // pred_region
      _
    $region17: #{tpu_custom_call.1} parent=1 // pred_fallthru
      _
    // Predicated region
    $region18: #{tpu_custom_call.1} parent=1 // pred_check
      _
    $region19: #{tpu_custom_call.1} parent=1 // pred_check_branch
      %23 = sbr.rel (0) target = $region21
    $region20: #{tpu_custom_call.1} parent=1 // pred_region
      _
    $region21: #{tpu_custom_call.1} parent=1 // pred_fallthru
      _
    %v25 = vld [vmem:[%s0] sm:$0xff]
    %v26 = vpack.c.bf16 %v25, %v25
    %v27 = vld [vmem:[%s1] sm:$0xf]
    %v28 = vld [vmem:[%s1 + $0x4] sm:$0xf]
    %v29 = vld [vmem:[%s1 + $0x8] sm:$0xf]
    %v30 = vld [vmem:[%s1 + $0xc] sm:$0xf]
    %v31 = vld [vmem:[%s3] sm:$0xf]
    %v32 = vld [vmem:[%s3 + $0x4] sm:$0xf]
    %v33 = vld [vmem:[%s3 + $0x8] sm:$0xf]
    %v34 = vld [vmem:[%s3 + $0xc] sm:$0xf]
    %v35 = vld [vmem:[%s3 + $0x10] sm:$0xf]
    %v36 = vld [vmem:[%s3 + $0x14] sm:$0xf]
    %v37 = vld [vmem:[%s3 + $0x18] sm:$0xf]
    %v38 = vld [vmem:[%s3 + $0x1c] sm:$0xf]
    %v39 = vld [vmem:[%s3 + $0x20] sm:$0xf]
    %v40 = vld [vmem:[%s3 + $0x24] sm:$0xf]
    %v41 = vld [vmem:[%s3 + $0x28] sm:$0xf]
    %v42 = vld [vmem:[%s3 + $0x2c] sm:$0xf]
    %v43 = vld [vmem:[%s3 + $0x30] sm:$0xf]
    %v44 = vld [vmem:[%s3 + $0x34] sm:$0xf]
    %v45 = vld [vmem:[%s3 + $0x38] sm:$0xf]
    %v46 = vld [vmem:[%s3 + $0x3c] sm:$0xf]
    %v47 = vld [vmem:[%s2] sm:$0x1]
    %v48 = vld [vmem:[%s4] sm:$0x1]
    %v50 = vlaneseq
    %v51 = vshrl.u32 %v50, 7
    %v52 = vsub.s32 0, %v51
    %v53 = vrot.slane %v47, %v52
    %v59 = vunpack.c.l.b16 %v27
    %v60 = vunpack.c.l.b16 %v28
    %v61 = vunpack.c.l.b16 %v29
    %v62 = vunpack.c.l.b16 %v30
    %v63 = vpack.c.b16 %v60, %v59
    %v64 = vpack.c.b16 %v62, %v61
    %vm67 = vcmask 261120
    %v69 = vsel %vm67, %v26, 0
    %71 = vmatprep.subr.bf16.mxu0 0
    %72 = vmatpush1.bf16.msra.mxu0 0
    %73 = vmatprep.subr.bf16.mxu0 0
    %74 = vmatpush1.bf16.msra.mxu0 0
    %75 = vmatprep.subr.bf16.mxu0 0
    %76 = vmatpush1.bf16.msra.mxu0 0
    %77 = vmatprep.subr.bf16.mxu0 0
    %78 = vmatpush1.bf16.msra.mxu0 0
    %79 = vmatprep.subr.bf16.mxu0 0
    %80 = vmatpush1.bf16.msra.mxu0 0
    %81 = vmatprep.subr.bf16.mxu0 0
    %82 = vmatpush1.bf16.msra.mxu0 0
    %83 = vmatprep.subr.bf16.mxu0 0
    %84 = vmatpush1.bf16.msra.mxu0 %v64
    %85 = vmatprep.subr.bf16.mxu0 0
    %86 = vmatpush1.bf16.msra.mxu0 %v63
    %87 = vmatprep.subr.bf16.mxu0 0
    %88 = vmatpush2.bf16.msra.mxu0 0
    %89 = vmatprep.subr.bf16.mxu0 0
    %90 = vmatpush2.bf16.msra.mxu0 0
    %91 = vmatprep.subr.bf16.mxu0 0
    %92 = vmatpush2.bf16.msra.mxu0 0
    %93 = vmatprep.subr.bf16.mxu0 0
    %94 = vmatpush2.bf16.msra.mxu0 0
    %95 = vmatprep.subr.bf16.mxu0 0
    %96 = vmatpush2.bf16.msra.mxu0 0
    %97 = vmatprep.subr.bf16.mxu0 0
    %98 = vmatpush2.bf16.msra.mxu0 0
    %99 = vmatprep.subr.bf16.mxu0 0
    %100 = vmatpush2.bf16.msra.mxu0 0
    %101 = vmatprep.subr.bf16.mxu0 0
    %102 = vmatpush2.bf16.msra.mxu0 0
    %103 = vmatprep.mubr.bf16.mxu0 0
    %104 = vmatmul.mubr.bf16.gmra.mxu0 %v69
    %v105 = vpop.f32.mrf.mxu0
    %v106 = vadd.f32 %v53, %v105
    %v107 = vpop.f32.mrf.mxu0
    %v108 = vpop.f32.mrf.mxu0
    %v109 = vpop.f32.mrf.mxu0
    %110 = vdwg.mxu0
    %v111 = vmax.f32 %v106, 0.0
    %v112 = vpack.c.bf16 %v111, %v111
    %v114 = vlaneseq
    %v115 = vshrl.u32 %v114, 7
    %v116 = vsub.s32 0, %v115
    %v117 = vrot.slane %v48, %v116
    %v135 = vunpack.c.l.b16 %v31
    %v136 = vunpack.c.l.b16 %v32
    %v137 = vunpack.c.l.b16 %v33
    %v138 = vunpack.c.l.b16 %v34
    %v139 = vunpack.c.l.b16 %v35
    %v140 = vunpack.c.l.b16 %v36
    %v141 = vunpack.c.l.b16 %v37
    %v142 = vunpack.c.l.b16 %v38
    %v143 = vunpack.c.l.b16 %v39
    %v144 = vunpack.c.l.b16 %v40
    %v145 = vunpack.c.l.b16 %v41
    %v146 = vunpack.c.l.b16 %v42
    %v147 = vunpack.c.l.b16 %v43
    %v148 = vunpack.c.l.b16 %v44
    %v149 = vunpack.c.l.b16 %v45
    %v150 = vunpack.c.l.b16 %v46
    %v151 = vpack.c.b16 %v136, %v135
    %v152 = vpack.c.b16 %v138, %v137
    %v153 = vpack.c.b16 %v140, %v139
    %v154 = vpack.c.b16 %v142, %v141
    %v155 = vpack.c.b16 %v144, %v143
    %v156 = vpack.c.b16 %v146, %v145
    %v157 = vpack.c.b16 %v148, %v147
    %v158 = vpack.c.b16 %v150, %v149
    %167 = vmatprep.subr.bf16.mxu0 0
    %168 = vmatpush1.bf16.msra.mxu0 %v158
    %169 = vmatprep.subr.bf16.mxu0 0
    %170 = vmatpush1.bf16.msra.mxu0 %v157
    %171 = vmatprep.subr.bf16.mxu0 0
    %172 = vmatpush1.bf16.msra.mxu0 %v156
    %173 = vmatprep.subr.bf16.mxu0 0
    %174 = vmatpush1.bf16.msra.mxu0 %v155
    %175 = vmatprep.subr.bf16.mxu0 0
    %176 = vmatpush1.bf16.msra.mxu0 %v154
    %177 = vmatprep.subr.bf16.mxu0 0
    %178 = vmatpush1.bf16.msra.mxu0 %v153
    %179 = vmatprep.subr.bf16.mxu0 0
    %180 = vmatpush1.bf16.msra.mxu0 %v152
    %181 = vmatprep.subr.bf16.mxu0 0
    %182 = vmatpush1.bf16.msra.mxu0 %v151
    %183 = vmatprep.subr.bf16.mxu0 0
    %184 = vmatpush2.bf16.msra.mxu0 0
    %185 = vmatprep.subr.bf16.mxu0 0
    %186 = vmatpush2.bf16.msra.mxu0 0
    %187 = vmatprep.subr.bf16.mxu0 0
    %188 = vmatpush2.bf16.msra.mxu0 0
    %189 = vmatprep.subr.bf16.mxu0 0
    %190 = vmatpush2.bf16.msra.mxu0 0
    %191 = vmatprep.subr.bf16.mxu0 0
    %192 = vmatpush2.bf16.msra.mxu0 0
    %193 = vmatprep.subr.bf16.mxu0 0
    %194 = vmatpush2.bf16.msra.mxu0 0
    %195 = vmatprep.subr.bf16.mxu0 0
    %196 = vmatpush2.bf16.msra.mxu0 0
    %197 = vmatprep.subr.bf16.mxu0 0
    %198 = vmatpush2.bf16.msra.mxu0 0
    %199 = vmatprep.mubr.bf16.mxu0 0
    %200 = vmatmul.mubr.bf16.gmra.mxu0 %v112
    %v201 = vpop.f32.mrf.mxu0
    %v202 = vadd.f32 %v117, %v201
    %v203 = vpop.f32.mrf.mxu0
    %v204 = vpop.f32.mrf.mxu0
    %v205 = vpop.f32.mrf.mxu0
    %206 = vdwg.mxu0
    %v207 = vpack.c.bf16 %v202, %v202
    %v209 = vsel %vm67, %v207, 0
    %211 = vmatprep.subr.bf16.mxu0 0
    %212 = vmatpush1.bf16.msra.mxu0 0
    %213 = vmatprep.subr.bf16.mxu0 0
    %214 = vmatpush1.bf16.msra.mxu0 0
    %215 = vmatprep.subr.bf16.mxu0 0
    %216 = vmatpush1.bf16.msra.mxu0 0
    %217 = vmatprep.subr.bf16.mxu0 0
    %218 = vmatpush1.bf16.msra.mxu0 0
    %219 = vmatprep.subr.bf16.mxu0 0
    %220 = vmatpush1.bf16.msra.mxu0 0
    %221 = vmatprep.subr.bf16.mxu0 0
    %222 = vmatpush1.bf16.msra.mxu0 0
    %223 = vmatprep.subr.bf16.mxu0 0
    %224 = vmatpush1.bf16.msra.mxu0 %v64
    %225 = vmatprep.subr.bf16.mxu0 0
    %226 = vmatpush1.bf16.msra.mxu0 %v63
    %227 = vmatprep.subr.bf16.mxu0 0
    %228 = vmatpush2.bf16.msra.mxu0 0
    %229 = vmatprep.subr.bf16.mxu0 0
    %230 = vmatpush2.bf16.msra.mxu0 0
    %231 = vmatprep.subr.bf16.mxu0 0
    %232 = vmatpush2.bf16.msra.mxu0 0
    %233 = vmatprep.subr.bf16.mxu0 0
    %234 = vmatpush2.bf16.msra.mxu0 0
    %235 = vmatprep.subr.bf16.mxu0 0
    %236 = vmatpush2.bf16.msra.mxu0 0
    %237 = vmatprep.subr.bf16.mxu0 0
    %238 = vmatpush2.bf16.msra.mxu0 0
    %239 = vmatprep.subr.bf16.mxu0 0
    %240 = vmatpush2.bf16.msra.mxu0 0
    %241 = vmatprep.subr.bf16.mxu0 0
    %242 = vmatpush2.bf16.msra.mxu0 0
    %243 = vmatprep.mubr.bf16.mxu0 0
    %244 = vmatmul.mubr.bf16.gmra.mxu0 %v209
    %v245 = vpop.f32.mrf.mxu0
    %v246 = vadd.f32 %v53, %v245
    %v247 = vpop.f32.mrf.mxu0
    %v248 = vpop.f32.mrf.mxu0
    %v249 = vpop.f32.mrf.mxu0
    %250 = vdwg.mxu0
    %v251 = vmax.f32 %v246, 0.0
    %v252 = vpack.c.bf16 %v251, %v251
    %253 = vmatprep.subr.bf16.mxu0 0
    %254 = vmatpush1.bf16.msra.mxu0 %v158
    %255 = vmatprep.subr.bf16.mxu0 0
    %256 = vmatpush1.bf16.msra.mxu0 %v157
    %257 = vmatprep.subr.bf16.mxu0 0
    %258 = vmatpush1.bf16.msra.mxu0 %v156
    %259 = vmatprep.subr.bf16.mxu0 0
    %260 = vmatpush1.bf16.msra.mxu0 %v155
    %261 = vmatprep.subr.bf16.mxu0 0
    %262 = vmatpush1.bf16.msra.mxu0 %v154
    %263 = vmatprep.subr.bf16.mxu0 0
    %264 = vmatpush1.bf16.msra.mxu0 %v153
    %265 = vmatprep.subr.bf16.mxu0 0
    %266 = vmatpush1.bf16.msra.mxu0 %v152
    %267 = vmatprep.subr.bf16.mxu0 0
    %268 = vmatpush1.bf16.msra.mxu0 %v151
    %269 = vmatprep.subr.bf16.mxu0 0
    %270 = vmatpush2.bf16.msra.mxu0 0
    %271 = vmatprep.subr.bf16.mxu0 0
    %272 = vmatpush2.bf16.msra.mxu0 0
    %273 = vmatprep.subr.bf16.mxu0 0
    %274 = vmatpush2.bf16.msra.mxu0 0
    %275 = vmatprep.subr.bf16.mxu0 0
    %276 = vmatpush2.bf16.msra.mxu0 0
    %277 = vmatprep.subr.bf16.mxu0 0
    %278 = vmatpush2.bf16.msra.mxu0 0
    %279 = vmatprep.subr.bf16.mxu0 0
    %280 = vmatpush2.bf16.msra.mxu0 0
    %281 = vmatprep.subr.bf16.mxu0 0
    %282 = vmatpush2.bf16.msra.mxu0 0
    %283 = vmatprep.subr.bf16.mxu0 0
    %284 = vmatpush2.bf16.msra.mxu0 0
    %285 = vmatprep.mubr.bf16.mxu0 0
    %286 = vmatmul.mubr.bf16.gmra.mxu0 %v252
    %v287 = vpop.f32.mrf.mxu0
    %v288 = vadd.f32 %v117, %v287
    %v289 = vpop.f32.mrf.mxu0
    %v290 = vpop.f32.mrf.mxu0
    %v291 = vpop.f32.mrf.mxu0
    %292 = vdwg.mxu0
    %293 = vst.msk [vmem:[#allocation2] sm:$0xff] %vm67, %v288
    %294 = vst.msk [vmem:[#allocation4] sm:$0xff] %vm67, %v202
    // Predicated region
    $region22: #{tpu_custom_call.1} parent=1 // pred_check
      _
    $region23: #{tpu_custom_call.1} parent=1 // pred_check_branch
      %296 = sbr.rel (0) target = $region25
    $region24: #{tpu_custom_call.1} parent=1 // pred_region
      %s298 = ssub.s32 128, 128
      %299 = vsyncadd [#allocation3], %s298
      %s301 = sshll.u32 [#allocation2], 4
      %s302 = int_to_ptr.vmem [resolvable:$true] %s301
      %304 = dma.vmem_to_hbm [thread:$0]  %s302, 128, %s5, [#allocation3]
    $region25: #{tpu_custom_call.1} parent=1 // pred_fallthru
      _
    // Predicated region
    $region26: #{tpu_custom_call.1} parent=1 // pred_check
      _
    $region27: #{tpu_custom_call.1} parent=1 // pred_check_branch
      %306 = sbr.rel (0) target = $region29
    $region28: #{tpu_custom_call.1} parent=1 // pred_region
      %s308 = ssub.s32 128, 128
      %309 = vsyncadd [#allocation5], %s308
      %s311 = sshll.u32 [#allocation4], 4
      %s312 = int_to_ptr.vmem [resolvable:$true] %s311
      %314 = dma.vmem_to_hbm [thread:$0]  %s312, 128, %s6, [#allocation5]
    $region29: #{tpu_custom_call.1} parent=1 // pred_fallthru
      _
    // Predicated region
    $region30: #{tpu_custom_call.1} parent=1 // pred_check
      _
    $region31: #{tpu_custom_call.1} parent=1 // pred_check_branch
      %316 = sbr.rel (0) target = $region33
    $region32: #{tpu_custom_call.1} parent=1 // pred_region
      %317 = dma.done [#allocation3], 128
    $region33: #{tpu_custom_call.1} parent=1 // pred_fallthru
      _
    // Predicated region
    $region34: #{tpu_custom_call.1} parent=1 // pred_check
      _
    $region35: #{tpu_custom_call.1} parent=1 // pred_check_branch
      %319 = sbr.rel (0) target = $region37
    $region36: #{tpu_custom_call.1} parent=1 // pred_region
      %320 = dma.done [#allocation5], 128
    $region37: #{tpu_custom_call.1} parent=1 // pred_fallthru
      _
    %321 = vsyncpa [#allocation3], 1
    %322 = vsyncpa [#allocation5], 1

</llo_original>
